<compile_context>
chip_gen: v7x
topology: tpu7x:2x2x1
jax: 0.10.0
libtpu: 0.0.40
codegen_flags: <defaults>
</compile_context>

<pallas_src>
import jax
import jax.numpy as jnp
from jax.experimental import pallas as pl
from jax.experimental.pallas import tpu as pltpu

CP = 128  # class dimension padded to one full lane width (lane-dense output slab)


def make_oh_model(B, L, V, H, C):
    """Builds (forward, prepare_params) for OhModel at static shapes."""
    LV, LH = L * V, L * H
    assert C < CP

    def kernel(x_ref, w1_ref, b1_ref, w2_ref, b2_ref, out_ref, h_ref):
        w1 = w1_ref[...]          # (V, H) bf16 -- raw weight, no block-diag
        b1 = b1_ref[...]          # (1, H) f32
        # Stage 1: linear1 + ReLU. Static (trace-time unrolled) loop over positions;
        # each iteration is a (B,V)@(V,H) MXU pass with f32 accumulation, writing the
        # l-th 32-lane window of the (B, L*H) scratch => torch Flatten order l*H + h.
        for l in range(L):
            xs = x_ref[:, l * V:(l + 1) * V]                                  # (B, V)
            acc = jnp.dot(xs, w1, preferred_element_type=jnp.float32)         # (B, H) f32
            h_ref[:, l * H:(l + 1) * H] = jnp.maximum(acc + b1, 0.0).astype(h_ref.dtype)
        # Stage 2: Flatten + linear2 as ONE lane-dense MXU pass (K=L*H, N=128 padded).
        p = jnp.dot(h_ref[...], w2_ref[...], preferred_element_type=jnp.float32)
        p = p + b2_ref[...]                                                   # (B, CP) f32
        # argmax over the C valid lanes, first-occurrence tie-break (== torch/jnp argmax);
        # padded lanes masked to -inf. XLU reductions -- essentially free here.
        lane = jax.lax.broadcasted_iota(jnp.int32, (B, CP), 1)
        pm = jnp.where(lane < C, p, -jnp.inf)
        is_max = pm == jnp.max(pm, axis=-1, keepdims=True)
        arg = jnp.min(jnp.where(is_max, lane, CP), axis=-1, keepdims=True)    # (B, 1) int32
        # Single lane-dense output slab: cols 0..C-1 = logits, col C = argmax as f32
        # (exact since 0 <= arg < C << 2^24).
        out_ref[...] = jnp.where(lane == C, arg.astype(jnp.float32), p)

    bytes_accessed = (B * LV * 2 + V * H * 2 + H * 4        # x, w1, b1
                      + LH * CP * 2 + CP * 4                # w2 (padded), b2 (padded)
                      + B * CP * 4)                         # output slab
    call = pl.pallas_call(
        kernel,
        out_shape=jax.ShapeDtypeStruct((B, CP), jnp.float32),
        in_specs=[pl.BlockSpec(memory_space=pltpu.MemorySpace.VMEM)] * 5,
        out_specs=pl.BlockSpec(memory_space=pltpu.MemorySpace.VMEM),
        scratch_shapes=[pltpu.VMEM((B, LH), jnp.bfloat16)],
        cost_estimate=pl.CostEstimate(
            flops=2 * B * LV * H + 2 * B * LH * CP,
            transcendentals=0,
            bytes_accessed=bytes_accessed),
    )

    def prepare_params(w1, b1, w2, b2):
        """One-time parameter relayout (hoisted out of the hot path).

        torch layouts: w1 (H, V), b1 (H,), w2 (C, L*H), b2 (C,).
        Weights -> bf16 (MXU-native, halves DMA/VMEM); biases stay f32 so all
        post-accumulation elementwise math remains f32 (v5e-friendly).
        """
        w1t = w1.T.astype(jnp.bfloat16)                                      # (V, H)
        b1r = b1.astype(jnp.float32)[None, :]                                # (1, H)
        w2p = jnp.pad(w2.T.astype(jnp.float32), ((0, 0), (0, CP - C)))       # (L*H, CP)
        w2p = w2p.astype(jnp.bfloat16)
        b2r = jnp.pad(b2.astype(jnp.float32), (0, CP - C))[None, :]          # (1, CP)
        return w1t, b1r, w2p, b2r

    @jax.jit
    def forward(text_onehot, params):
        w1t, b1r, w2p, b2r = params
        # (B, L, V) -> (B, L*V): contiguous row-major merge, metadata-only under XLA.
        x2 = text_onehot.reshape(B, LV).astype(jnp.bfloat16)
        out = call(x2, w1t, b1r, w2p, b2r)          # (B, 128) lane-dense slab
        p = out[:, :C]                              # logits
        pre = out[:, C].astype(jnp.int32)           # self.pre (argmax)
        return p, pre

    return forward, prepare_params


if __name__ == "__main__":
    # small shapes consistent with the module
    B = 2    # batch
    L = 8    # max_len
    V = 32   # curpus_len (one-hot width)
    H = 32   # hidden_num
    C = 4    # class_num

    key = jax.random.PRNGKey(0)
    k_x, k_w1, k_b1, k_w2, k_b2 = jax.random.split(key, 5)

    # one-hot text input (B, L, V)
    tok = jax.random.randint(k_x, (B, L), 0, V)
    x = jax.nn.one_hot(tok, V, dtype=jnp.float32)

    # deterministic parameter init (torch Linear-style uniform bounds, torch layouts)
    bound1 = 1.0 / jnp.sqrt(jnp.float32(V))
    w1 = jax.random.uniform(k_w1, (H, V), jnp.float32, -bound1, bound1)
    b1 = jax.random.uniform(k_b1, (H,), jnp.float32, -bound1, bound1)
    bound2 = 1.0 / jnp.sqrt(jnp.float32(L * H))
    w2 = jax.random.uniform(k_w2, (C, L * H), jnp.float32, -bound2, bound2)
    b2 = jax.random.uniform(k_b2, (C,), jnp.float32, -bound2, bound2)

    forward, prepare_params = make_oh_model(B, L, V, H, C)
    params = prepare_params(w1, b1, w2, b2)     # one-time relayout, outside hot path
    jax.block_until_ready(params)

    p, pre = forward(x, params)
    jax.block_until_ready((p, pre))

    # pure-JAX f32 reference of the torch forward (kernel uses bf16 operands with f32
    # accumulation -> loose tolerance, per review).
    ref_h = jnp.maximum(jnp.einsum("blv,hv->blh", x, w1) + b1, 0.0)
    ref_p = ref_h.reshape(B, L * H) @ w2.T + b2
    assert jnp.allclose(p, ref_p, rtol=2e-2, atol=2e-2), "logits mismatch vs reference"
    # in-kernel argmax must agree exactly with argmax of the logits the kernel returned
    assert jnp.array_equal(pre, jnp.argmax(p, axis=-1).astype(pre.dtype)), \
        "argmax not consistent with logits"

    print("KERNEL_OK")
</pallas_src>

<mosaic_0001>
module attributes {stable_mosaic.version = 11 : i64} {
  func.func @kernel(%arg0: memref<2x256xbf16, #tpu.memory_space<vmem>>, %arg1: memref<32x32xbf16, #tpu.memory_space<vmem>>, %arg2: memref<1x32xf32, #tpu.memory_space<vmem>>, %arg3: memref<256x128xbf16, #tpu.memory_space<vmem>>, %arg4: memref<1x128xf32, #tpu.memory_space<vmem>>, %arg5: memref<2x128xf32, #tpu.memory_space<vmem>>, %arg6: memref<2x256xbf16, #tpu.memory_space<vmem>>) attributes {dimension_semantics = [], scalar_prefetch = 0 : i64, scratch_operands = 1 : i64, tpu.core_type = #tpu.core_type<tc>} {
    %c0 = arith.constant 0 : index
    %c0_0 = arith.constant 0 : index
    %0 = vector.load %arg1[%c0, %c0_0] : memref<32x32xbf16, #tpu.memory_space<vmem>>, vector<32x32xbf16>
    %c0_1 = arith.constant 0 : index
    %c0_2 = arith.constant 0 : index
    %1 = vector.load %arg2[%c0_1, %c0_2] : memref<1x32xf32, #tpu.memory_space<vmem>>, vector<1x32xf32>
    %c0_3 = arith.constant 0 : index
    %c0_4 = arith.constant 0 : index
    %2 = vector.load %arg0[%c0_3, %c0_4] : memref<2x256xbf16, #tpu.memory_space<vmem>>, vector<2x32xbf16>
    %cst = arith.constant dense<0.000000e+00> : vector<2x32xf32>
    %3 = tpu.matmul %2, %0, %cst {dimension_numbers = #tpu.dot_dimension_numbers<[1], [0], [0], [1], [0, 0, 1, 1], [], []>} : vector<2x32xbf16>, vector<32x32xbf16>, vector<2x32xf32> -> vector<2x32xf32>
    %4 = vector.broadcast %1 : vector<1x32xf32> to vector<2x32xf32>
    %5 = arith.addf %3, %4 : vector<2x32xf32>
    %cst_5 = arith.constant 0.000000e+00 : f32
    %6 = vector.broadcast %cst_5 : f32 to vector<2x32xf32>
    %7 = arith.maximumf %5, %6 : vector<2x32xf32>
    %8 = arith.truncf %7 : vector<2x32xf32> to vector<2x32xbf16>
    %c0_6 = arith.constant 0 : index
    %c0_7 = arith.constant 0 : index
    %9 = vector.load %arg6[%c0_6, %c0_7] : memref<2x256xbf16, #tpu.memory_space<vmem>>, vector<2x32xbf16>
    tpu.vector_store %arg6[%c0_6, %c0_7], %8 {strides = array<i32>} : memref<2x256xbf16, #tpu.memory_space<vmem>>, vector<2x32xbf16>,
    %c0_8 = arith.constant 0 : index
    %c32 = arith.constant 32 : index
    %10 = vector.load %arg0[%c0_8, %c32] : memref<2x256xbf16, #tpu.memory_space<vmem>>, vector<2x32xbf16>
    %cst_9 = arith.constant dense<0.000000e+00> : vector<2x32xf32>
    %11 = tpu.matmul %10, %0, %cst_9 {dimension_numbers = #tpu.dot_dimension_numbers<[1], [0], [0], [1], [0, 0, 1, 1], [], []>} : vector<2x32xbf16>, vector<32x32xbf16>, vector<2x32xf32> -> vector<2x32xf32>
    %12 = vector.broadcast %1 : vector<1x32xf32> to vector<2x32xf32>
    %13 = arith.addf %11, %12 : vector<2x32xf32>
    %cst_10 = arith.constant 0.000000e+00 : f32
    %14 = vector.broadcast %cst_10 : f32 to vector<2x32xf32>
    %15 = arith.maximumf %13, %14 : vector<2x32xf32>
    %16 = arith.truncf %15 : vector<2x32xf32> to vector<2x32xbf16>
    %c0_11 = arith.constant 0 : index
    %c32_12 = arith.constant 32 : index
    %17 = vector.load %arg6[%c0_11, %c32_12] : memref<2x256xbf16, #tpu.memory_space<vmem>>, vector<2x32xbf16>
    tpu.vector_store %arg6[%c0_11, %c32_12], %16 {strides = array<i32>} : memref<2x256xbf16, #tpu.memory_space<vmem>>, vector<2x32xbf16>,
    %c0_13 = arith.constant 0 : index
    %c64 = arith.constant 64 : index
    %18 = vector.load %arg0[%c0_13, %c64] : memref<2x256xbf16, #tpu.memory_space<vmem>>, vector<2x32xbf16>
    %cst_14 = arith.constant dense<0.000000e+00> : vector<2x32xf32>
    %19 = tpu.matmul %18, %0, %cst_14 {dimension_numbers = #tpu.dot_dimension_numbers<[1], [0], [0], [1], [0, 0, 1, 1], [], []>} : vector<2x32xbf16>, vector<32x32xbf16>, vector<2x32xf32> -> vector<2x32xf32>
    %20 = vector.broadcast %1 : vector<1x32xf32> to vector<2x32xf32>
    %21 = arith.addf %19, %20 : vector<2x32xf32>
    %cst_15 = arith.constant 0.000000e+00 : f32
    %22 = vector.broadcast %cst_15 : f32 to vector<2x32xf32>
    %23 = arith.maximumf %21, %22 : vector<2x32xf32>
    %24 = arith.truncf %23 : vector<2x32xf32> to vector<2x32xbf16>
    %c0_16 = arith.constant 0 : index
    %c64_17 = arith.constant 64 : index
    %25 = vector.load %arg6[%c0_16, %c64_17] : memref<2x256xbf16, #tpu.memory_space<vmem>>, vector<2x32xbf16>
    tpu.vector_store %arg6[%c0_16, %c64_17], %24 {strides = array<i32>} : memref<2x256xbf16, #tpu.memory_space<vmem>>, vector<2x32xbf16>,
    %c0_18 = arith.constant 0 : index
    %c96 = arith.constant 96 : index
    %26 = vector.load %arg0[%c0_18, %c96] : memref<2x256xbf16, #tpu.memory_space<vmem>>, vector<2x32xbf16>
    %cst_19 = arith.constant dense<0.000000e+00> : vector<2x32xf32>
    %27 = tpu.matmul %26, %0, %cst_19 {dimension_numbers = #tpu.dot_dimension_numbers<[1], [0], [0], [1], [0, 0, 1, 1], [], []>} : vector<2x32xbf16>, vector<32x32xbf16>, vector<2x32xf32> -> vector<2x32xf32>
    %28 = vector.broadcast %1 : vector<1x32xf32> to vector<2x32xf32>
    %29 = arith.addf %27, %28 : vector<2x32xf32>
    %cst_20 = arith.constant 0.000000e+00 : f32
    %30 = vector.broadcast %cst_20 : f32 to vector<2x32xf32>
    %31 = arith.maximumf %29, %30 : vector<2x32xf32>
    %32 = arith.truncf %31 : vector<2x32xf32> to vector<2x32xbf16>
    %c0_21 = arith.constant 0 : index
    %c96_22 = arith.constant 96 : index
    %33 = vector.load %arg6[%c0_21, %c96_22] : memref<2x256xbf16, #tpu.memory_space<vmem>>, vector<2x32xbf16>
    tpu.vector_store %arg6[%c0_21, %c96_22], %32 {strides = array<i32>} : memref<2x256xbf16, #tpu.memory_space<vmem>>, vector<2x32xbf16>,
    %c0_23 = arith.constant 0 : index
    %c128 = arith.constant 128 : index
    %34 = vector.load %arg0[%c0_23, %c128] : memref<2x256xbf16, #tpu.memory_space<vmem>>, vector<2x32xbf16>
    %cst_24 = arith.constant dense<0.000000e+00> : vector<2x32xf32>
    %35 = tpu.matmul %34, %0, %cst_24 {dimension_numbers = #tpu.dot_dimension_numbers<[1], [0], [0], [1], [0, 0, 1, 1], [], []>} : vector<2x32xbf16>, vector<32x32xbf16>, vector<2x32xf32> -> vector<2x32xf32>
    %36 = vector.broadcast %1 : vector<1x32xf32> to vector<2x32xf32>
    %37 = arith.addf %35, %36 : vector<2x32xf32>
    %cst_25 = arith.constant 0.000000e+00 : f32
    %38 = vector.broadcast %cst_25 : f32 to vector<2x32xf32>
    %39 = arith.maximumf %37, %38 : vector<2x32xf32>
    %40 = arith.truncf %39 : vector<2x32xf32> to vector<2x32xbf16>
    %c0_26 = arith.constant 0 : index
    %c128_27 = arith.constant 128 : index
    %41 = vector.load %arg6[%c0_26, %c128_27] : memref<2x256xbf16, #tpu.memory_space<vmem>>, vector<2x32xbf16>
    tpu.vector_store %arg6[%c0_26, %c128_27], %40 {strides = array<i32>} : memref<2x256xbf16, #tpu.memory_space<vmem>>, vector<2x32xbf16>,
    %c0_28 = arith.constant 0 : index
    %c160 = arith.constant 160 : index
    %42 = vector.load %arg0[%c0_28, %c160] : memref<2x256xbf16, #tpu.memory_space<vmem>>, vector<2x32xbf16>
    %cst_29 = arith.constant dense<0.000000e+00> : vector<2x32xf32>
    %43 = tpu.matmul %42, %0, %cst_29 {dimension_numbers = #tpu.dot_dimension_numbers<[1], [0], [0], [1], [0, 0, 1, 1], [], []>} : vector<2x32xbf16>, vector<32x32xbf16>, vector<2x32xf32> -> vector<2x32xf32>
    %44 = vector.broadcast %1 : vector<1x32xf32> to vector<2x32xf32>
    %45 = arith.addf %43, %44 : vector<2x32xf32>
    %cst_30 = arith.constant 0.000000e+00 : f32
    %46 = vector.broadcast %cst_30 : f32 to vector<2x32xf32>
    %47 = arith.maximumf %45, %46 : vector<2x32xf32>
    %48 = arith.truncf %47 : vector<2x32xf32> to vector<2x32xbf16>
    %c0_31 = arith.constant 0 : index
    %c160_32 = arith.constant 160 : index
    %49 = vector.load %arg6[%c0_31, %c160_32] : memref<2x256xbf16, #tpu.memory_space<vmem>>, vector<2x32xbf16>
    tpu.vector_store %arg6[%c0_31, %c160_32], %48 {strides = array<i32>} : memref<2x256xbf16, #tpu.memory_space<vmem>>, vector<2x32xbf16>,
    %c0_33 = arith.constant 0 : index
    %c192 = arith.constant 192 : index
    %50 = vector.load %arg0[%c0_33, %c192] : memref<2x256xbf16, #tpu.memory_space<vmem>>, vector<2x32xbf16>
    %cst_34 = arith.constant dense<0.000000e+00> : vector<2x32xf32>
    %51 = tpu.matmul %50, %0, %cst_34 {dimension_numbers = #tpu.dot_dimension_numbers<[1], [0], [0], [1], [0, 0, 1, 1], [], []>} : vector<2x32xbf16>, vector<32x32xbf16>, vector<2x32xf32> -> vector<2x32xf32>
    %52 = vector.broadcast %1 : vector<1x32xf32> to vector<2x32xf32>
    %53 = arith.addf %51, %52 : vector<2x32xf32>
    %cst_35 = arith.constant 0.000000e+00 : f32
    %54 = vector.broadcast %cst_35 : f32 to vector<2x32xf32>
    %55 = arith.maximumf %53, %54 : vector<2x32xf32>
    %56 = arith.truncf %55 : vector<2x32xf32> to vector<2x32xbf16>
    %c0_36 = arith.constant 0 : index
    %c192_37 = arith.constant 192 : index
    %57 = vector.load %arg6[%c0_36, %c192_37] : memref<2x256xbf16, #tpu.memory_space<vmem>>, vector<2x32xbf16>
    tpu.vector_store %arg6[%c0_36, %c192_37], %56 {strides = array<i32>} : memref<2x256xbf16, #tpu.memory_space<vmem>>, vector<2x32xbf16>,
    %c0_38 = arith.constant 0 : index
    %c224 = arith.constant 224 : index
    %58 = vector.load %arg0[%c0_38, %c224] : memref<2x256xbf16, #tpu.memory_space<vmem>>, vector<2x32xbf16>
    %cst_39 = arith.constant dense<0.000000e+00> : vector<2x32xf32>
    %59 = tpu.matmul %58, %0, %cst_39 {dimension_numbers = #tpu.dot_dimension_numbers<[1], [0], [0], [1], [0, 0, 1, 1], [], []>} : vector<2x32xbf16>, vector<32x32xbf16>, vector<2x32xf32> -> vector<2x32xf32>
    %60 = vector.broadcast %1 : vector<1x32xf32> to vector<2x32xf32>
    %61 = arith.addf %59, %60 : vector<2x32xf32>
    %cst_40 = arith.constant 0.000000e+00 : f32
    %62 = vector.broadcast %cst_40 : f32 to vector<2x32xf32>
    %63 = arith.maximumf %61, %62 : vector<2x32xf32>
    %64 = arith.truncf %63 : vector<2x32xf32> to vector<2x32xbf16>
    %c0_41 = arith.constant 0 : index
    %c224_42 = arith.constant 224 : index
    %65 = vector.load %arg6[%c0_41, %c224_42] : memref<2x256xbf16, #tpu.memory_space<vmem>>, vector<2x32xbf16>
    tpu.vector_store %arg6[%c0_41, %c224_42], %64 {strides = array<i32>} : memref<2x256xbf16, #tpu.memory_space<vmem>>, vector<2x32xbf16>,
    %c0_43 = arith.constant 0 : index
    %c0_44 = arith.constant 0 : index
    %66 = vector.load %arg6[%c0_43, %c0_44] : memref<2x256xbf16, #tpu.memory_space<vmem>>, vector<2x256xbf16>
    %c0_45 = arith.constant 0 : index
    %c0_46 = arith.constant 0 : index
    %67 = vector.load %arg3[%c0_45, %c0_46] : memref<256x128xbf16, #tpu.memory_space<vmem>>, vector<256x128xbf16>
    %cst_47 = arith.constant dense<0.000000e+00> : vector<2x128xf32>
    %68 = tpu.matmul %66, %67, %cst_47 {dimension_numbers = #tpu.dot_dimension_numbers<[1], [0], [0], [1], [0, 0, 1, 1], [], []>} : vector<2x256xbf16>, vector<256x128xbf16>, vector<2x128xf32> -> vector<2x128xf32>
    %c0_48 = arith.constant 0 : index
    %c0_49 = arith.constant 0 : index
    %69 = vector.load %arg4[%c0_48, %c0_49] : memref<1x128xf32, #tpu.memory_space<vmem>>, vector<1x128xf32>
    %70 = vector.broadcast %69 : vector<1x128xf32> to vector<2x128xf32>
    %71 = arith.addf %68, %70 : vector<2x128xf32>
    %72 = tpu.iota {dimensions = array<i32: 1>} : vector<2x128xi32>
    %c4_i32 = arith.constant 4 : i32
    %73 = vector.broadcast %c4_i32 : i32 to vector<2x128xi32>
    %74 = arith.cmpi slt, %72, %73 : vector<2x128xi32>
    %cst_50 = arith.constant 0xFF800000 : f32
    %75 = vector.broadcast %cst_50 : f32 to vector<2x128xf32>
    %76 = arith.select %74, %71, %75 : vector<2x128xi1>, vector<2x128xf32>
    %cst_51 = arith.constant dense<0xFF800000> : vector<2xf32>
    %77 = vector.multi_reduction <maximumf>, %76, %cst_51 [1] : vector<2x128xf32> to vector<2xf32>
    %78 = vector.shape_cast %77 : vector<2xf32> to vector<2x1xf32>
    %79 = vector.broadcast %78 : vector<2x1xf32> to vector<2x128xf32>
    %80 = arith.cmpf oeq, %76, %79 : vector<2x128xf32>
    %c128_i32 = arith.constant 128 : i32
    %81 = vector.broadcast %c128_i32 : i32 to vector<2x128xi32>
    %82 = arith.select %80, %72, %81 : vector<2x128xi1>, vector<2x128xi32>
    %cst_52 = arith.constant dense<2147483647> : vector<2xi32>
    %83 = vector.multi_reduction <minsi>, %82, %cst_52 [1] : vector<2x128xi32> to vector<2xi32>
    %84 = vector.shape_cast %83 : vector<2xi32> to vector<2x1xi32>
    %c4_i32_53 = arith.constant 4 : i32
    %85 = vector.broadcast %c4_i32_53 : i32 to vector<2x128xi32>
    %86 = arith.cmpi eq, %72, %85 : vector<2x128xi32>
    %87 = arith.sitofp %84 : vector<2x1xi32> to vector<2x1xf32>
    %88 = vector.shape_cast %87 : vector<2x1xf32> to vector<2x1xf32>
    %89 = vector.broadcast %88 : vector<2x1xf32> to vector<2x128xf32>
    %90 = arith.select %86, %89, %71 : vector<2x128xi1>, vector<2x128xf32>
    %c0_54 = arith.constant 0 : index
    %c0_55 = arith.constant 0 : index
    %91 = vector.load %arg5[%c0_54, %c0_55] : memref<2x128xf32, #tpu.memory_space<vmem>>, vector<2x128xf32>
    tpu.vector_store %arg5[%c0_54, %c0_55], %90 {strides = array<i32>} : memref<2x128xf32, #tpu.memory_space<vmem>>, vector<2x128xf32>,
    return
  }
}

</mosaic_0001>

<llo_original>
// kernel: forward.1
$region0: #{forward.1}
  #allocation0 [shape = 'u32[]', space=smem, size = 0x4, offset = 0x4, fixed_abs, tag = 'smem constant byte address 0x4 - core index']
  #allocation1 [shape = 'u32[144,128]{1,0:T(1,128)}', space=vmem, size = 0x12000, scoped, tag = 'internal scratch']
  #allocation2 [shape = 'bf16[2,256]{1,0:T(2,128)(2,1)}', space=vmem, size = 0x400, scoped, tag = 'scratch operand']
  %s0 = inlined_call_operand.vmem [shape: bf16[2,256], index: 0, kind: input, shape index: {}]
  %s1 = inlined_call_operand.vmem [shape: bf16[32,32], index: 1, kind: input, shape index: {}]
  %s2 = inlined_call_operand.vmem [shape: f32[1,32], index: 2, kind: input, shape index: {}]
  %s3 = inlined_call_operand.hbm [shape: bf16[256,128], index: 3, kind: input, shape index: {}]
  %s4 = inlined_call_operand.vmem [shape: f32[1,128], index: 4, kind: input, shape index: {}]
  %s5 = inlined_call_operand.vmem [shape: f32[2,128], index: 5, kind: output, shape index: {}]
  %s6 = sld [smem:[#allocation0]]
  $region34: #{forward.1} parent=0
    _
  %s8 = ssub.s32 1, %s6
  %s9 = scalar_select 0, %s8, %s6
  $region1: #{forward.1} parent=0
    #allocation3 [shape = 'u8[65536]{0}', space=vmem, size = 0x10000, scoped, tag = 'input window, operand 3, single buffered']
    #allocation4 [shape = 's32[1]{0}', space=sflag, size = 0x4, scoped, tag = 'scoped memory for forward.1']
    %10 = vsyncpa [#allocation4], 0
    // Predicated region
    $region2: #{forward.1} parent=1 // pred_check
      _
    $region3: #{forward.1} parent=1 // pred_check_branch
      %12 = sbr.rel (0) target = $region5
    $region4: #{forward.1} parent=1 // pred_region
      _
    $region5: #{forward.1} parent=1 // pred_fallthru
      _
    // Predicated region
    $region6: #{forward.1} parent=1 // pred_check
      _
    $region7: #{forward.1} parent=1 // pred_check_branch
      %14 = sbr.rel (0) target = $region9
    $region8: #{forward.1} parent=1 // pred_region
      _
    $region9: #{forward.1} parent=1 // pred_fallthru
      _
    // Predicated region
    $region10: #{forward.1} parent=1 // pred_check
      _
    $region11: #{forward.1} parent=1 // pred_check_branch
      %16 = sbr.rel (0) target = $region13
    $region12: #{forward.1} parent=1 // pred_region
      _
    $region13: #{forward.1} parent=1 // pred_fallthru
      _
    // Predicated region
    $region14: #{forward.1} parent=1 // pred_check
      _
    $region15: #{forward.1} parent=1 // pred_check_branch
      %18 = sbr.rel (0) target = $region17
    $region16: #{forward.1} parent=1 // pred_region
      %s20 = ssub.s32 2048, 2048
      %21 = vsyncadd [#allocation4], %s20
      %s22 = sshll.u32 [#allocation3], 4
      %s23 = int_to_ptr.vmem [resolvable:$true] %s22
      %28 = dma.hbm_to_vmem [thread:$0]  %s3, 2048, %s23, [#allocation4], 64, 64, 4
    $region17: #{forward.1} parent=1 // pred_fallthru
      _
    // Predicated region
    $region18: #{forward.1} parent=1 // pred_check
      _
    $region19: #{forward.1} parent=1 // pred_check_branch
      %30 = sbr.rel (0) target = $region21
    $region20: #{forward.1} parent=1 // pred_region
      _
    $region21: #{forward.1} parent=1 // pred_fallthru
      _
    // Predicated region
    $region22: #{forward.1} parent=1 // pred_check
      _
    $region23: #{forward.1} parent=1 // pred_check_branch
      %32 = sbr.rel (0) target = $region25
    $region24: #{forward.1} parent=1 // pred_region
      %33 = dma.done [#allocation4], 2048
    $region25: #{forward.1} parent=1 // pred_fallthru
      _
    %v35 = vld [vmem:[%s1] sm:$0xf]
    %v36 = vld [vmem:[%s1 + $0x4] sm:$0xf]
    %v37 = vld [vmem:[%s1 + $0x8] sm:$0xf]
    %v38 = vld [vmem:[%s1 + $0xc] sm:$0xf]
    %v39 = vld [vmem:[%s2] sm:$0x1]
    %v40 = vld [vmem:[%s0] sm:$0x1]
    %v42 = vlaneseq
    %v43 = vshrl.u32 %v42, 7
    %v44 = vsub.s32 0, %v43
    %v45 = vrot.slane %v39, %v44
    %v51 = vunpack.c.l.b16 %v35
    %v52 = vunpack.c.l.b16 %v36
    %v53 = vunpack.c.l.b16 %v37
    %v54 = vunpack.c.l.b16 %v38
    %v55 = vpack.c.b16 %v52, %v51
    %v56 = vpack.c.b16 %v54, %v53
    %vm59 = vcmask 261120
    %v61 = vsel %vm59, %v40, 0
    %63 = vmatprep.subr.bf16.mxu0 0
    %64 = vmatpush1.bf16.msra.mxu0 %v55
    %65 = vmatprep.subr.bf16.mxu0 0
    %66 = vmatpush1.bf16.msra.mxu0 %v56
    %67 = vmatprep.subr.bf16.mxu0 0
    %68 = vmatpush1.bf16.msra.mxu0 0
    %69 = vmatprep.subr.bf16.mxu0 0
    %70 = vmatpush1.bf16.msra.mxu0 0
    %71 = vmatprep.subr.bf16.mxu0 0
    %72 = vmatpush1.bf16.msra.mxu0 0
    %73 = vmatprep.subr.bf16.mxu0 0
    %74 = vmatpush1.bf16.msra.mxu0 0
    %75 = vmatprep.subr.bf16.mxu0 0
    %76 = vmatpush1.bf16.msra.mxu0 0
    %77 = vmatprep.subr.bf16.mxu0 0
    %78 = vmatpush1.bf16.msra.mxu0 0
    %79 = vmatprep.subr.bf16.mxu0 0
    %80 = vmatpush1.bf16.msra.mxu0 0
    %81 = vmatprep.subr.bf16.mxu0 0
    %82 = vmatpush1.bf16.msra.mxu0 0
    %83 = vmatprep.subr.bf16.mxu0 0
    %84 = vmatpush1.bf16.msra.mxu0 0
    %85 = vmatprep.subr.bf16.mxu0 0
    %86 = vmatpush1.bf16.msra.mxu0 0
    %87 = vmatprep.subr.bf16.mxu0 0
    %88 = vmatpush1.bf16.msra.mxu0 0
    %89 = vmatprep.subr.bf16.mxu0 0
    %90 = vmatpush1.bf16.msra.mxu0 0
    %91 = vmatprep.subr.bf16.mxu0 0
    %92 = vmatpush1.bf16.msra.mxu0 0
    %93 = vmatprep.subr.bf16.mxu0 0
    %94 = vmatpush1.bf16.msra.mxu0 0
    %95 = vmatprep.mubr.bf16.mxu0 0
    %96 = vmatmul.mubr.bf16.gmra.mrb[0].mxu0 %v61
    %v97 = vpop.f32.mrb[0].mxu0
    %v98 = vadd.f32 %v45, %v97
    %v99 = vpop.f32.mrb[0].mxu0
    %v100 = vpop.f32.mrb[0].mxu0
    %v101 = vpop.f32.mrb[0].mxu0
    %102 = vdwg.mxu0
    %v103 = vmax.f32 %v98, 0.0
    %v104 = vpack.c.bf16 %v103, %v103
    %vm105 = vcmask 253952
    %106 = vst.msk [vmem:[#allocation2] sm:$0x1] %vm105, %v104
    %v107 = vld [vmem:[%s0] sm:$0x1]
    %v110 = vunpack.c.l.s4 1966171168
    %v111 = vunpack.c.0.s8 %v110
    %v112 = vlaneseq
    %v113 = vshrl.u32 %v112, 7
    %v114 = vsub.s32 %v111, %v113
    %v115 = vrot.slane %v107, %v114
    %v117 = vunpack.c.l.s4 1966171168
    %v118 = vunpack.c.0.s8 %v117
    %v119 = vlaneseq
    %v120 = vshrl.u32 %v119, 7
    %v121 = vsub.s32 %v118, %v120
    %v122 = vrot.slane %v115, %v121
    %123 = vrot.lane.b32.xlu0 %v122, 96
    %v124 = vpop.permute.xlu0 %123
    %v126 = vsel %vm59, %v124, 0
    %128 = vmatprep.subr.bf16.mxu0 0
    %129 = vmatpush1.bf16.msra.mxu0 %v55
    %130 = vmatprep.subr.bf16.mxu0 0
    %131 = vmatpush1.bf16.msra.mxu0 %v56
    %132 = vmatprep.subr.bf16.mxu0 0
    %133 = vmatpush1.bf16.msra.mxu0 0
    %134 = vmatprep.subr.bf16.mxu0 0
    %135 = vmatpush1.bf16.msra.mxu0 0
    %136 = vmatprep.subr.bf16.mxu0 0
    %137 = vmatpush1.bf16.msra.mxu0 0
    %138 = vmatprep.subr.bf16.mxu0 0
    %139 = vmatpush1.bf16.msra.mxu0 0
    %140 = vmatprep.subr.bf16.mxu0 0
    %141 = vmatpush1.bf16.msra.mxu0 0
    %142 = vmatprep.subr.bf16.mxu0 0
    %143 = vmatpush1.bf16.msra.mxu0 0
    %144 = vmatprep.subr.bf16.mxu0 0
    %145 = vmatpush1.bf16.msra.mxu0 0
    %146 = vmatprep.subr.bf16.mxu0 0
    %147 = vmatpush1.bf16.msra.mxu0 0
    %148 = vmatprep.subr.bf16.mxu0 0
    %149 = vmatpush1.bf16.msra.mxu0 0
    %150 = vmatprep.subr.bf16.mxu0 0
    %151 = vmatpush1.bf16.msra.mxu0 0
    %152 = vmatprep.subr.bf16.mxu0 0
    %153 = vmatpush1.bf16.msra.mxu0 0
    %154 = vmatprep.subr.bf16.mxu0 0
    %155 = vmatpush1.bf16.msra.mxu0 0
    %156 = vmatprep.subr.bf16.mxu0 0
    %157 = vmatpush1.bf16.msra.mxu0 0
    %158 = vmatprep.subr.bf16.mxu0 0
    %159 = vmatpush1.bf16.msra.mxu0 0
    %160 = vmatprep.mubr.bf16.mxu0 0
    %161 = vmatmul.mubr.bf16.gmra.mrb[0].mxu0 %v126
    %v162 = vpop.f32.mrb[0].mxu0
    %v163 = vadd.f32 %v45, %v162
    %v164 = vpop.f32.mrb[0].mxu0
    %v165 = vpop.f32.mrb[0].mxu0
    %v166 = vpop.f32.mrb[0].mxu0
    %167 = vdwg.mxu0
    %v168 = vmax.f32 %v163, 0.0
    %v169 = vpack.c.bf16 %v168, %v168
    %v172 = vunpack.c.l.s4 1966171168
    %v173 = vunpack.c.0.s8 %v172
    %v174 = vlaneseq
    %v175 = vshrl.u32 %v174, 7
    %v176 = vsub.s32 %v173, %v175
    %v177 = vrot.slane %v169, %v176
    %v179 = vunpack.c.l.s4 1966171168
    %v180 = vunpack.c.0.s8 %v179
    %v181 = vlaneseq
    %v182 = vshrl.u32 %v181, 7
    %v183 = vsub.s32 %v180, %v182
    %v184 = vrot.slane %v177, %v183
    %185 = vrot.lane.b32.xlu0 %v184, 32
    %v186 = vpop.permute.xlu0 %185
    %vm188 = vcmask 516352
    %189 = vst.msk [vmem:[#allocation2] sm:$0x1] %vm188, %v186
    %v190 = vld [vmem:[%s0] sm:$0x1]
    %v193 = vunpack.c.l.s4 1966171168
    %v194 = vunpack.c.0.s8 %v193
    %v195 = vlaneseq
    %v196 = vshrl.u32 %v195, 7
    %v197 = vsub.s32 %v194, %v196
    %v198 = vrot.slane %v190, %v197
    %v200 = vunpack.c.l.s4 1966171168
    %v201 = vunpack.c.0.s8 %v200
    %v202 = vlaneseq
    %v203 = vshrl.u32 %v202, 7
    %v204 = vsub.s32 %v201, %v203
    %v205 = vrot.slane %v198, %v204
    %206 = vrot.lane.b32.xlu0 %v205, 64
    %v207 = vpop.permute.xlu0 %206
    %v209 = vsel %vm59, %v207, 0
    %211 = vmatprep.subr.bf16.mxu0 0
    %212 = vmatpush1.bf16.msra.mxu0 %v55
    %213 = vmatprep.subr.bf16.mxu0 0
    %214 = vmatpush1.bf16.msra.mxu0 %v56
    %215 = vmatprep.subr.bf16.mxu0 0
    %216 = vmatpush1.bf16.msra.mxu0 0
    %217 = vmatprep.subr.bf16.mxu0 0
    %218 = vmatpush1.bf16.msra.mxu0 0
    %219 = vmatprep.subr.bf16.mxu0 0
    %220 = vmatpush1.bf16.msra.mxu0 0
    %221 = vmatprep.subr.bf16.mxu0 0
    %222 = vmatpush1.bf16.msra.mxu0 0
    %223 = vmatprep.subr.bf16.mxu0 0
    %224 = vmatpush1.bf16.msra.mxu0 0
    %225 = vmatprep.subr.bf16.mxu0 0
    %226 = vmatpush1.bf16.msra.mxu0 0
    %227 = vmatprep.subr.bf16.mxu0 0
    %228 = vmatpush1.bf16.msra.mxu0 0
    %229 = vmatprep.subr.bf16.mxu0 0
    %230 = vmatpush1.bf16.msra.mxu0 0
    %231 = vmatprep.subr.bf16.mxu0 0
    %232 = vmatpush1.bf16.msra.mxu0 0
    %233 = vmatprep.subr.bf16.mxu0 0
    %234 = vmatpush1.bf16.msra.mxu0 0
    %235 = vmatprep.subr.bf16.mxu0 0
    %236 = vmatpush1.bf16.msra.mxu0 0
    %237 = vmatprep.subr.bf16.mxu0 0
    %238 = vmatpush1.bf16.msra.mxu0 0
    %239 = vmatprep.subr.bf16.mxu0 0
    %240 = vmatpush1.bf16.msra.mxu0 0
    %241 = vmatprep.subr.bf16.mxu0 0
    %242 = vmatpush1.bf16.msra.mxu0 0
    %243 = vmatprep.mubr.bf16.mxu0 0
    %244 = vmatmul.mubr.bf16.gmra.mrb[0].mxu0 %v209
    %v245 = vpop.f32.mrb[0].mxu0
    %v246 = vadd.f32 %v45, %v245
    %v247 = vpop.f32.mrb[0].mxu0
    %v248 = vpop.f32.mrb[0].mxu0
    %v249 = vpop.f32.mrb[0].mxu0
    %250 = vdwg.mxu0
    %v251 = vmax.f32 %v246, 0.0
    %v252 = vpack.c.bf16 %v251, %v251
    %v255 = vunpack.c.l.s4 1966171168
    %v256 = vunpack.c.0.s8 %v255
    %v257 = vlaneseq
    %v258 = vshrl.u32 %v257, 7
    %v259 = vsub.s32 %v256, %v258
    %v260 = vrot.slane %v252, %v259
    %v262 = vunpack.c.l.s4 1966171168
    %v263 = vunpack.c.0.s8 %v262
    %v264 = vlaneseq
    %v265 = vshrl.u32 %v264, 7
    %v266 = vsub.s32 %v263, %v265
    %v267 = vrot.slane %v260, %v266
    %268 = vrot.lane.b32.xlu0 %v267, 64
    %v269 = vpop.permute.xlu0 %268
    %vm271 = vcmask 778752
    %272 = vst.msk [vmem:[#allocation2] sm:$0x1] %vm271, %v269
    %v273 = vld [vmem:[%s0] sm:$0x1]
    %v276 = vunpack.c.l.s4 1966171168
    %v277 = vunpack.c.0.s8 %v276
    %v278 = vlaneseq
    %v279 = vshrl.u32 %v278, 7
    %v280 = vsub.s32 %v277, %v279
    %v281 = vrot.slane %v273, %v280
    %v283 = vunpack.c.l.s4 1966171168
    %v284 = vunpack.c.0.s8 %v283
    %v285 = vlaneseq
    %v286 = vshrl.u32 %v285, 7
    %v287 = vsub.s32 %v284, %v286
    %v288 = vrot.slane %v281, %v287
    %289 = vrot.lane.b32.xlu0 %v288, 32
    %v290 = vpop.permute.xlu0 %289
    %v292 = vsel %vm59, %v290, 0
    %294 = vmatprep.subr.bf16.mxu0 0
    %295 = vmatpush1.bf16.msra.mxu0 %v55
    %296 = vmatprep.subr.bf16.mxu0 0
    %297 = vmatpush1.bf16.msra.mxu0 %v56
    %298 = vmatprep.subr.bf16.mxu0 0
    %299 = vmatpush1.bf16.msra.mxu0 0
    %300 = vmatprep.subr.bf16.mxu0 0
    %301 = vmatpush1.bf16.msra.mxu0 0
    %302 = vmatprep.subr.bf16.mxu0 0
    %303 = vmatpush1.bf16.msra.mxu0 0
    %304 = vmatprep.subr.bf16.mxu0 0
    %305 = vmatpush1.bf16.msra.mxu0 0
    %306 = vmatprep.subr.bf16.mxu0 0
    %307 = vmatpush1.bf16.msra.mxu0 0
    %308 = vmatprep.subr.bf16.mxu0 0
    %309 = vmatpush1.bf16.msra.mxu0 0
    %310 = vmatprep.subr.bf16.mxu0 0
    %311 = vmatpush1.bf16.msra.mxu0 0
    %312 = vmatprep.subr.bf16.mxu0 0
    %313 = vmatpush1.bf16.msra.mxu0 0
    %314 = vmatprep.subr.bf16.mxu0 0
    %315 = vmatpush1.bf16.msra.mxu0 0
    %316 = vmatprep.subr.bf16.mxu0 0
    %317 = vmatpush1.bf16.msra.mxu0 0
    %318 = vmatprep.subr.bf16.mxu0 0
    %319 = vmatpush1.bf16.msra.mxu0 0
    %320 = vmatprep.subr.bf16.mxu0 0
    %321 = vmatpush1.bf16.msra.mxu0 0
    %322 = vmatprep.subr.bf16.mxu0 0
    %323 = vmatpush1.bf16.msra.mxu0 0
    %324 = vmatprep.subr.bf16.mxu0 0
    %325 = vmatpush1.bf16.msra.mxu0 0
    %326 = vmatprep.mubr.bf16.mxu0 0
    %327 = vmatmul.mubr.bf16.gmra.mrb[0].mxu0 %v292
    %v328 = vpop.f32.mrb[0].mxu0
    %v329 = vadd.f32 %v45, %v328
    %v330 = vpop.f32.mrb[0].mxu0
    %v331 = vpop.f32.mrb[0].mxu0
    %v332 = vpop.f32.mrb[0].mxu0
    %333 = vdwg.mxu0
    %v334 = vmax.f32 %v329, 0.0
    %v335 = vpack.c.bf16 %v334, %v334
    %v338 = vunpack.c.l.s4 1966171168
    %v339 = vunpack.c.0.s8 %v338
    %v340 = vlaneseq
    %v341 = vshrl.u32 %v340, 7
    %v342 = vsub.s32 %v339, %v341
    %v343 = vrot.slane %v335, %v342
    %v345 = vunpack.c.l.s4 1966171168
    %v346 = vunpack.c.0.s8 %v345
    %v347 = vlaneseq
    %v348 = vshrl.u32 %v347, 7
    %v349 = vsub.s32 %v346, %v348
    %v350 = vrot.slane %v343, %v349
    %351 = vrot.lane.b32.xlu0 %v350, 96
    %v352 = vpop.permute.xlu0 %351
    %vm354 = vcmask 1041152
    %355 = vst.msk [vmem:[#allocation2] sm:$0x1] %vm354, %v352
    %v356 = vld [vmem:[%s0 + $0x1] sm:$0x1]
    %v358 = vsel %vm59, %v356, 0
    %360 = vmatprep.subr.bf16.mxu0 0
    %361 = vmatpush1.bf16.msra.mxu0 %v55
    %362 = vmatprep.subr.bf16.mxu0 0
    %363 = vmatpush1.bf16.msra.mxu0 %v56
    %364 = vmatprep.subr.bf16.mxu0 0
    %365 = vmatpush1.bf16.msra.mxu0 0
    %366 = vmatprep.subr.bf16.mxu0 0
    %367 = vmatpush1.bf16.msra.mxu0 0
    %368 = vmatprep.subr.bf16.mxu0 0
    %369 = vmatpush1.bf16.msra.mxu0 0
    %370 = vmatprep.subr.bf16.mxu0 0
    %371 = vmatpush1.bf16.msra.mxu0 0
    %372 = vmatprep.subr.bf16.mxu0 0
    %373 = vmatpush1.bf16.msra.mxu0 0
    %374 = vmatprep.subr.bf16.mxu0 0
    %375 = vmatpush1.bf16.msra.mxu0 0
    %376 = vmatprep.subr.bf16.mxu0 0
    %377 = vmatpush1.bf16.msra.mxu0 0
    %378 = vmatprep.subr.bf16.mxu0 0
    %379 = vmatpush1.bf16.msra.mxu0 0
    %380 = vmatprep.subr.bf16.mxu0 0
    %381 = vmatpush1.bf16.msra.mxu0 0
    %382 = vmatprep.subr.bf16.mxu0 0
    %383 = vmatpush1.bf16.msra.mxu0 0
    %384 = vmatprep.subr.bf16.mxu0 0
    %385 = vmatpush1.bf16.msra.mxu0 0
    %386 = vmatprep.subr.bf16.mxu0 0
    %387 = vmatpush1.bf16.msra.mxu0 0
    %388 = vmatprep.subr.bf16.mxu0 0
    %389 = vmatpush1.bf16.msra.mxu0 0
    %390 = vmatprep.subr.bf16.mxu0 0
    %391 = vmatpush1.bf16.msra.mxu0 0
    %392 = vmatprep.mubr.bf16.mxu0 0
    %393 = vmatmul.mubr.bf16.gmra.mrb[0].mxu0 %v358
    %v394 = vpop.f32.mrb[0].mxu0
    %v395 = vadd.f32 %v45, %v394
    %v396 = vpop.f32.mrb[0].mxu0
    %v397 = vpop.f32.mrb[0].mxu0
    %v398 = vpop.f32.mrb[0].mxu0
    %399 = vdwg.mxu0
    %v400 = vmax.f32 %v395, 0.0
    %v401 = vpack.c.bf16 %v400, %v400
    %402 = vst.msk [vmem:[#allocation2 + $0x1] sm:$0x1] %vm105, %v401
    %v403 = vld [vmem:[%s0 + $0x1] sm:$0x1]
    %v406 = vunpack.c.l.s4 1966171168
    %v407 = vunpack.c.0.s8 %v406
    %v408 = vlaneseq
    %v409 = vshrl.u32 %v408, 7
    %v410 = vsub.s32 %v407, %v409
    %v411 = vrot.slane %v403, %v410
    %v413 = vunpack.c.l.s4 1966171168
    %v414 = vunpack.c.0.s8 %v413
    %v415 = vlaneseq
    %v416 = vshrl.u32 %v415, 7
    %v417 = vsub.s32 %v414, %v416
    %v418 = vrot.slane %v411, %v417
    %419 = vrot.lane.b32.xlu0 %v418, 96
    %v420 = vpop.permute.xlu0 %419
    %v422 = vsel %vm59, %v420, 0
    %424 = vmatprep.subr.bf16.mxu0 0
    %425 = vmatpush1.bf16.msra.mxu0 %v55
    %426 = vmatprep.subr.bf16.mxu0 0
    %427 = vmatpush1.bf16.msra.mxu0 %v56
    %428 = vmatprep.subr.bf16.mxu0 0
    %429 = vmatpush1.bf16.msra.mxu0 0
    %430 = vmatprep.subr.bf16.mxu0 0
    %431 = vmatpush1.bf16.msra.mxu0 0
    %432 = vmatprep.subr.bf16.mxu0 0
    %433 = vmatpush1.bf16.msra.mxu0 0
    %434 = vmatprep.subr.bf16.mxu0 0
    %435 = vmatpush1.bf16.msra.mxu0 0
    %436 = vmatprep.subr.bf16.mxu0 0
    %437 = vmatpush1.bf16.msra.mxu0 0
    %438 = vmatprep.subr.bf16.mxu0 0
    %439 = vmatpush1.bf16.msra.mxu0 0
    %440 = vmatprep.subr.bf16.mxu0 0
    %441 = vmatpush1.bf16.msra.mxu0 0
    %442 = vmatprep.subr.bf16.mxu0 0
    %443 = vmatpush1.bf16.msra.mxu0 0
    %444 = vmatprep.subr.bf16.mxu0 0
    %445 = vmatpush1.bf16.msra.mxu0 0
    %446 = vmatprep.subr.bf16.mxu0 0
    %447 = vmatpush1.bf16.msra.mxu0 0
    %448 = vmatprep.subr.bf16.mxu0 0
    %449 = vmatpush1.bf16.msra.mxu0 0
    %450 = vmatprep.subr.bf16.mxu0 0
    %451 = vmatpush1.bf16.msra.mxu0 0
    %452 = vmatprep.subr.bf16.mxu0 0
    %453 = vmatpush1.bf16.msra.mxu0 0
    %454 = vmatprep.subr.bf16.mxu0 0
    %455 = vmatpush1.bf16.msra.mxu0 0
    %456 = vmatprep.mubr.bf16.mxu0 0
    %457 = vmatmul.mubr.bf16.gmra.mrb[0].mxu0 %v422
    %v458 = vpop.f32.mrb[0].mxu0
    %v459 = vadd.f32 %v45, %v458
    %v460 = vpop.f32.mrb[0].mxu0
    %v461 = vpop.f32.mrb[0].mxu0
    %v462 = vpop.f32.mrb[0].mxu0
    %463 = vdwg.mxu0
    %v464 = vmax.f32 %v459, 0.0
    %v465 = vpack.c.bf16 %v464, %v464
    %v468 = vunpack.c.l.s4 1966171168
    %v469 = vunpack.c.0.s8 %v468
    %v470 = vlaneseq
    %v471 = vshrl.u32 %v470, 7
    %v472 = vsub.s32 %v469, %v471
    %v473 = vrot.slane %v465, %v472
    %v475 = vunpack.c.l.s4 1966171168
    %v476 = vunpack.c.0.s8 %v475
    %v477 = vlaneseq
    %v478 = vshrl.u32 %v477, 7
    %v479 = vsub.s32 %v476, %v478
    %v480 = vrot.slane %v473, %v479
    %481 = vrot.lane.b32.xlu0 %v480, 32
    %v482 = vpop.permute.xlu0 %481
    %484 = vst.msk [vmem:[#allocation2 + $0x1] sm:$0x1] %vm188, %v482
    %v485 = vld [vmem:[%s0 + $0x1] sm:$0x1]
    %v488 = vunpack.c.l.s4 1966171168
    %v489 = vunpack.c.0.s8 %v488
    %v490 = vlaneseq
    %v491 = vshrl.u32 %v490, 7
    %v492 = vsub.s32 %v489, %v491
    %v493 = vrot.slane %v485, %v492
    %v495 = vunpack.c.l.s4 1966171168
    %v496 = vunpack.c.0.s8 %v495
    %v497 = vlaneseq
    %v498 = vshrl.u32 %v497, 7
    %v499 = vsub.s32 %v496, %v498
    %v500 = vrot.slane %v493, %v499
    %501 = vrot.lane.b32.xlu0 %v500, 64
    %v502 = vpop.permute.xlu0 %501
    %v504 = vsel %vm59, %v502, 0
    %506 = vmatprep.subr.bf16.mxu0 0
    %507 = vmatpush1.bf16.msra.mxu0 %v55
    %508 = vmatprep.subr.bf16.mxu0 0
    %509 = vmatpush1.bf16.msra.mxu0 %v56
    %510 = vmatprep.subr.bf16.mxu0 0
    %511 = vmatpush1.bf16.msra.mxu0 0
    %512 = vmatprep.subr.bf16.mxu0 0
    %513 = vmatpush1.bf16.msra.mxu0 0
    %514 = vmatprep.subr.bf16.mxu0 0
    %515 = vmatpush1.bf16.msra.mxu0 0
    %516 = vmatprep.subr.bf16.mxu0 0
    %517 = vmatpush1.bf16.msra.mxu0 0
    %518 = vmatprep.subr.bf16.mxu0 0
    %519 = vmatpush1.bf16.msra.mxu0 0
    %520 = vmatprep.subr.bf16.mxu0 0
    %521 = vmatpush1.bf16.msra.mxu0 0
    %522 = vmatprep.subr.bf16.mxu0 0
    %523 = vmatpush1.bf16.msra.mxu0 0
    %524 = vmatprep.subr.bf16.mxu0 0
    %525 = vmatpush1.bf16.msra.mxu0 0
    %526 = vmatprep.subr.bf16.mxu0 0
    %527 = vmatpush1.bf16.msra.mxu0 0
    %528 = vmatprep.subr.bf16.mxu0 0
    %529 = vmatpush1.bf16.msra.mxu0 0
    %530 = vmatprep.subr.bf16.mxu0 0
    %531 = vmatpush1.bf16.msra.mxu0 0
    %532 = vmatprep.subr.bf16.mxu0 0
    %533 = vmatpush1.bf16.msra.mxu0 0
    %534 = vmatprep.subr.bf16.mxu0 0
    %535 = vmatpush1.bf16.msra.mxu0 0
    %536 = vmatprep.subr.bf16.mxu0 0
    %537 = vmatpush1.bf16.msra.mxu0 0
    %538 = vmatprep.mubr.bf16.mxu0 0
    %539 = vmatmul.mubr.bf16.gmra.mrb[0].mxu0 %v504
    %v540 = vpop.f32.mrb[0].mxu0
    %v541 = vadd.f32 %v45, %v540
    %v542 = vpop.f32.mrb[0].mxu0
    %v543 = vpop.f32.mrb[0].mxu0
    %v544 = vpop.f32.mrb[0].mxu0
    %545 = vdwg.mxu0
    %v546 = vmax.f32 %v541, 0.0
    %v547 = vpack.c.bf16 %v546, %v546
    %v550 = vunpack.c.l.s4 1966171168
    %v551 = vunpack.c.0.s8 %v550
    %v552 = vlaneseq
    %v553 = vshrl.u32 %v552, 7
    %v554 = vsub.s32 %v551, %v553
    %v555 = vrot.slane %v547, %v554
    %v557 = vunpack.c.l.s4 1966171168
    %v558 = vunpack.c.0.s8 %v557
    %v559 = vlaneseq
    %v560 = vshrl.u32 %v559, 7
    %v561 = vsub.s32 %v558, %v560
    %v562 = vrot.slane %v555, %v561
    %563 = vrot.lane.b32.xlu0 %v562, 64
    %v564 = vpop.permute.xlu0 %563
    %566 = vst.msk [vmem:[#allocation2 + $0x1] sm:$0x1] %vm271, %v564
    %v567 = vld [vmem:[%s0 + $0x1] sm:$0x1]
    %v570 = vunpack.c.l.s4 1966171168
    %v571 = vunpack.c.0.s8 %v570
    %v572 = vlaneseq
    %v573 = vshrl.u32 %v572, 7
    %v574 = vsub.s32 %v571, %v573
    %v575 = vrot.slane %v567, %v574
    %v577 = vunpack.c.l.s4 1966171168
    %v578 = vunpack.c.0.s8 %v577
    %v579 = vlaneseq
    %v580 = vshrl.u32 %v579, 7
    %v581 = vsub.s32 %v578, %v580
    %v582 = vrot.slane %v575, %v581
    %583 = vrot.lane.b32.xlu0 %v582, 32
    %v584 = vpop.permute.xlu0 %583
    %v586 = vsel %vm59, %v584, 0
    %588 = vmatprep.subr.bf16.mxu0 0
    %589 = vmatpush1.bf16.msra.mxu0 %v55
    %590 = vmatprep.subr.bf16.mxu0 0
    %591 = vmatpush1.bf16.msra.mxu0 %v56
    %592 = vmatprep.subr.bf16.mxu0 0
    %593 = vmatpush1.bf16.msra.mxu0 0
    %594 = vmatprep.subr.bf16.mxu0 0
    %595 = vmatpush1.bf16.msra.mxu0 0
    %596 = vmatprep.subr.bf16.mxu0 0
    %597 = vmatpush1.bf16.msra.mxu0 0
    %598 = vmatprep.subr.bf16.mxu0 0
    %599 = vmatpush1.bf16.msra.mxu0 0
    %600 = vmatprep.subr.bf16.mxu0 0
    %601 = vmatpush1.bf16.msra.mxu0 0
    %602 = vmatprep.subr.bf16.mxu0 0
    %603 = vmatpush1.bf16.msra.mxu0 0
    %604 = vmatprep.subr.bf16.mxu0 0
    %605 = vmatpush1.bf16.msra.mxu0 0
    %606 = vmatprep.subr.bf16.mxu0 0
    %607 = vmatpush1.bf16.msra.mxu0 0
    %608 = vmatprep.subr.bf16.mxu0 0
    %609 = vmatpush1.bf16.msra.mxu0 0
    %610 = vmatprep.subr.bf16.mxu0 0
    %611 = vmatpush1.bf16.msra.mxu0 0
    %612 = vmatprep.subr.bf16.mxu0 0
    %613 = vmatpush1.bf16.msra.mxu0 0
    %614 = vmatprep.subr.bf16.mxu0 0
    %615 = vmatpush1.bf16.msra.mxu0 0
    %616 = vmatprep.subr.bf16.mxu0 0
    %617 = vmatpush1.bf16.msra.mxu0 0
    %618 = vmatprep.subr.bf16.mxu0 0
    %619 = vmatpush1.bf16.msra.mxu0 0
    %620 = vmatprep.mubr.bf16.mxu0 0
    %621 = vmatmul.mubr.bf16.gmra.mrb[0].mxu0 %v586
    %v622 = vpop.f32.mrb[0].mxu0
    %v623 = vadd.f32 %v45, %v622
    %v624 = vpop.f32.mrb[0].mxu0
    %v625 = vpop.f32.mrb[0].mxu0
    %v626 = vpop.f32.mrb[0].mxu0
    %627 = vdwg.mxu0
    %v628 = vmax.f32 %v623, 0.0
    %v629 = vpack.c.bf16 %v628, %v628
    %v632 = vunpack.c.l.s4 1966171168
    %v633 = vunpack.c.0.s8 %v632
    %v634 = vlaneseq
    %v635 = vshrl.u32 %v634, 7
    %v636 = vsub.s32 %v633, %v635
    %v637 = vrot.slane %v629, %v636
    %v639 = vunpack.c.l.s4 1966171168
    %v640 = vunpack.c.0.s8 %v639
    %v641 = vlaneseq
    %v642 = vshrl.u32 %v641, 7
    %v643 = vsub.s32 %v640, %v642
    %v644 = vrot.slane %v637, %v643
    %645 = vrot.lane.b32.xlu0 %v644, 96
    %v646 = vpop.permute.xlu0 %645
    %648 = vst.msk [vmem:[#allocation2 + $0x1] sm:$0x1] %vm354, %v646
    %v649 = vld [vmem:[#allocation2] sm:$0x3]
    %v650 = vld [vmem:[#allocation3] sm:$0xf]
    %v651 = vld [vmem:[#allocation3 + $0x4] sm:$0xf]
    %v652 = vld [vmem:[#allocation3 + $0x8] sm:$0xf]
    %v653 = vld [vmem:[#allocation3 + $0xc] sm:$0xf]
    %v654 = vld [vmem:[#allocation3 + $0x10] sm:$0xf]
    %v655 = vld [vmem:[#allocation3 + $0x14] sm:$0xf]
    %v656 = vld [vmem:[#allocation3 + $0x18] sm:$0xf]
    %v657 = vld [vmem:[#allocation3 + $0x1c] sm:$0xf]
    %v658 = vld [vmem:[#allocation3 + $0x20] sm:$0xf]
    %v659 = vld [vmem:[#allocation3 + $0x24] sm:$0xf]
    %v660 = vld [vmem:[#allocation3 + $0x28] sm:$0xf]
    %v661 = vld [vmem:[#allocation3 + $0x2c] sm:$0xf]
    %v662 = vld [vmem:[#allocation3 + $0x30] sm:$0xf]
    %v663 = vld [vmem:[#allocation3 + $0x34] sm:$0xf]
    %v664 = vld [vmem:[#allocation3 + $0x38] sm:$0xf]
    %v665 = vld [vmem:[#allocation3 + $0x3c] sm:$0xf]
    %v666 = vld [vmem:[#allocation3 + $0x40] sm:$0xf]
    %v667 = vld [vmem:[#allocation3 + $0x44] sm:$0xf]
    %v668 = vld [vmem:[#allocation3 + $0x48] sm:$0xf]
    %v669 = vld [vmem:[#allocation3 + $0x4c] sm:$0xf]
    %v670 = vld [vmem:[#allocation3 + $0x50] sm:$0xf]
    %v671 = vld [vmem:[#allocation3 + $0x54] sm:$0xf]
    %v672 = vld [vmem:[#allocation3 + $0x58] sm:$0xf]
    %v673 = vld [vmem:[#allocation3 + $0x5c] sm:$0xf]
    %v674 = vld [vmem:[#allocation3 + $0x60] sm:$0xf]
    %v675 = vld [vmem:[#allocation3 + $0x64] sm:$0xf]
    %v676 = vld [vmem:[#allocation3 + $0x68] sm:$0xf]
    %v677 = vld [vmem:[#allocation3 + $0x6c] sm:$0xf]
    %v678 = vld [vmem:[#allocation3 + $0x70] sm:$0xf]
    %v679 = vld [vmem:[#allocation3 + $0x74] sm:$0xf]
    %v680 = vld [vmem:[#allocation3 + $0x78] sm:$0xf]
    %v681 = vld [vmem:[#allocation3 + $0x7c] sm:$0xf]
    %v682 = vld [vmem:[%s4] sm:$0x1]
    %v684 = vlaneseq
    %v685 = vshrl.u32 %v684, 7
    %v686 = vsub.s32 0, %v685
    %v687 = vrot.slane %v682, %v686
    %v691 = vunpack.c.l.s4 1966171168
    %v692 = vunpack.c.0.s8 %v691
    %v693 = vlaneseq
    %v694 = vshrl.u32 %v693, 7
    %v695 = vsub.s32 %v692, %v694
    %v696 = vrot.slane %v649, %v695
    %v697 = vcombine.high %v696, %v696
    %v699 = vunpack.c.l.s4 1966171168
    %v700 = vunpack.c.0.s8 %v699
    %v701 = vlaneseq
    %v702 = vshrl.u32 %v701, 7
    %v703 = vsub.s32 %v700, %v702
    %v704 = vrot.slane %v696, %v703
    %v706 = vunpack.c.l.s4 1966171168
    %v707 = vunpack.c.0.s8 %v706
    %v708 = vlaneseq
    %v709 = vshrl.u32 %v708, 7
    %v710 = vsub.s32 %v707, %v709
    %v711 = vrot.slane %v697, %v710
    %v746 = vunpack.c.l.b16 %v650
    %v747 = vunpack.c.l.b16 %v651
    %v748 = vunpack.c.l.b16 %v652
    %v749 = vunpack.c.l.b16 %v653
    %v750 = vunpack.c.l.b16 %v654
    %v751 = vunpack.c.l.b16 %v655
    %v752 = vunpack.c.l.b16 %v656
    %v753 = vunpack.c.l.b16 %v657
    %v754 = vunpack.c.l.b16 %v658
    %v755 = vunpack.c.l.b16 %v659
    %v756 = vunpack.c.l.b16 %v660
    %v757 = vunpack.c.l.b16 %v661
    %v758 = vunpack.c.l.b16 %v662
    %v759 = vunpack.c.l.b16 %v663
    %v760 = vunpack.c.l.b16 %v664
    %v761 = vunpack.c.l.b16 %v665
    %v762 = vunpack.c.l.b16 %v666
    %v763 = vunpack.c.l.b16 %v667
    %v764 = vunpack.c.l.b16 %v668
    %v765 = vunpack.c.l.b16 %v669
    %v766 = vunpack.c.l.b16 %v670
    %v767 = vunpack.c.l.b16 %v671
    %v768 = vunpack.c.l.b16 %v672
    %v769 = vunpack.c.l.b16 %v673
    %v770 = vunpack.c.l.b16 %v674
    %v771 = vunpack.c.l.b16 %v675
    %v772 = vunpack.c.l.b16 %v676
    %v773 = vunpack.c.l.b16 %v677
    %v774 = vunpack.c.l.b16 %v678
    %v775 = vunpack.c.l.b16 %v679
    %v776 = vunpack.c.l.b16 %v680
    %v777 = vunpack.c.l.b16 %v681
    %v778 = vpack.c.b16 %v747, %v746
    %v779 = vpack.c.b16 %v749, %v748
    %v780 = vpack.c.b16 %v751, %v750
    %v781 = vpack.c.b16 %v753, %v752
    %v782 = vpack.c.b16 %v755, %v754
    %v783 = vpack.c.b16 %v757, %v756
    %v784 = vpack.c.b16 %v759, %v758
    %v785 = vpack.c.b16 %v761, %v760
    %v786 = vpack.c.b16 %v763, %v762
    %v787 = vpack.c.b16 %v765, %v764
    %v788 = vpack.c.b16 %v767, %v766
    %v789 = vpack.c.b16 %v769, %v768
    %v790 = vpack.c.b16 %v771, %v770
    %v791 = vpack.c.b16 %v773, %v772
    %v792 = vpack.c.b16 %v775, %v774
    %v793 = vpack.c.b16 %v777, %v776
    %810 = vmatprep.subr.bf16.mxu0 0
    %811 = vmatpush1.bf16.msra.mxu0 %v778
    %812 = vmatprep.subr.bf16.mxu0 0
    %813 = vmatpush1.bf16.msra.mxu0 %v779
    %814 = vmatprep.subr.bf16.mxu0 0
    %815 = vmatpush1.bf16.msra.mxu0 %v780
    %816 = vmatprep.subr.bf16.mxu0 0
    %817 = vmatpush1.bf16.msra.mxu0 %v781
    %818 = vmatprep.subr.bf16.mxu0 0
    %819 = vmatpush1.bf16.msra.mxu0 %v782
    %820 = vmatprep.subr.bf16.mxu0 0
    %821 = vmatpush1.bf16.msra.mxu0 %v783
    %822 = vmatprep.subr.bf16.mxu0 0
    %823 = vmatpush1.bf16.msra.mxu0 %v784
    %824 = vmatprep.subr.bf16.mxu0 0
    %825 = vmatpush1.bf16.msra.mxu0 %v785
    %826 = vmatprep.subr.bf16.mxu0 0
    %827 = vmatpush1.bf16.msra.mxu0 %v786
    %828 = vmatprep.subr.bf16.mxu0 0
    %829 = vmatpush1.bf16.msra.mxu0 %v787
    %830 = vmatprep.subr.bf16.mxu0 0
    %831 = vmatpush1.bf16.msra.mxu0 %v788
    %832 = vmatprep.subr.bf16.mxu0 0
    %833 = vmatpush1.bf16.msra.mxu0 %v789
    %834 = vmatprep.subr.bf16.mxu0 0
    %835 = vmatpush1.bf16.msra.mxu0 %v790
    %836 = vmatprep.subr.bf16.mxu0 0
    %837 = vmatpush1.bf16.msra.mxu0 %v791
    %838 = vmatprep.subr.bf16.mxu0 0
    %839 = vmatpush1.bf16.msra.mxu0 %v792
    %840 = vmatprep.subr.bf16.mxu0 0
    %841 = vmatpush1.bf16.msra.mxu0 %v793
    %842 = vmatprep.mubr.bf16.mxu0 %v711
    %843 = vmatmul.mubr.bf16.gmra.mrb[0].mxu0 %v704
    %v844 = vpop.f32.mrb[0].mxu0
    %v845 = vadd.f32 %v687, %v844
    %v846 = vpop.f32.mrb[0].mxu0
    %v847 = vpop.f32.mrb[0].mxu0
    %v848 = vpop.f32.mrb[0].mxu0
    %849 = vdwg.mxu0
    %v850 = vlaneseq
    %v851 = vand.u32 %v850, 127
    %vm852 = vcmp.lt.s32.totalorder %v851, 4
    %v853 = vsel %vm852, %v845, -inf
    %vm854 = vcmask 1041408
    %v855 = vsel %vm854, %v853, -inf
    %856 = vmax.xlane.f32.xlu0 %v855
    %v857 = vpop.xlane.xlu0 %856
    %vm858 = vcmp.eq.f32.partialorder %v853, %v857
    %v859 = vsel %vm858, %v851, 128
    %v860 = vsel %vm854, %v859, 2147483647
    %v861 = vand.u32 %v860, 65535
    %v862 = vshra.s32 %v860, 16
    %v863 = vcvt.s32.f32 %v861
    %v864 = vcvt.s32.f32 %v862
    %865 = vmin.xlane.f32.xlu0 %v864
    %v866 = vpop.xlane.xlu0 %865
    %vm867 = vcmp.eq.f32.partialorder %v864, %v866
    %v868 = vsel %vm867, %v863, inf
    %869 = vmin.xlane.f32.xlu0 %v868
    %v870 = vpop.xlane.xlu0 %869
    %v871 = vcvt.f32.s32 %v870
    %v872 = vcvt.f32.s32 %v866
    %v873 = vshll.u32 %v872, 16
    %v874 = vadd.s32 %v873, %v871
    %vm875 = vcmp.eq.s32.totalorder %v851, 4
    %v876 = vcvt.s32.f32 %v874
    %v877 = vsel %vm875, %v876, %v845
    %878 = vst [vmem:[%s5] sm:$0x3] %v877
    // Predicated region
    $region26: #{forward.1} parent=1 // pred_check
      _
    $region27: #{forward.1} parent=1 // pred_check_branch
      %880 = sbr.rel (0) target = $region29
    $region28: #{forward.1} parent=1 // pred_region
      _
    $region29: #{forward.1} parent=1 // pred_fallthru
      _
    // Predicated region
    $region30: #{forward.1} parent=1 // pred_check
      _
    $region31: #{forward.1} parent=1 // pred_check_branch
      %882 = sbr.rel (0) target = $region33
    $region32: #{forward.1} parent=1 // pred_region
      _
    $region33: #{forward.1} parent=1 // pred_fallthru
      _
    %883 = vsyncpa [#allocation4], 1

</llo_original>
